<compile_context>
chip_gen: v7x
topology: tpu7x:2x2x1
jax: 0.10.0
libtpu: 0.0.40
codegen_flags: <defaults>
</compile_context>

<pallas_src>
import functools

import jax
import jax.numpy as jnp
from jax import lax
from jax.experimental import pallas as pl
from jax.experimental.pallas import tpu as pltpu


# ----------------------------- Pallas kernel ------------------------------ #
def _resample_kernel(x_ref, wy_ref, wxT_ref, out_ref, *, block_n, c):
    # x_ref  : (B, C, H, W)  raw (unpadded) images
    # wy_ref : (B, H, H)     row (y) bilinear weights, replicate-pad folded in
    # wxT_ref: (B, W, H)     col (x) bilinear weights (transposed), pad folded in
    # out_ref: (B, C, H, H)
    def body(b, carry):
        wy = wy_ref[b]                                   # (H, H), loaded once/image
        wxT = wxT_ref[b]                                  # (W, H), loaded once/image
        for ci in range(c):                               # static unroll over channels
            xc = x_ref[b, ci]                             # (H, W)  leading-dim index
            # Col (x) contraction on the MXU, f32 accumulation.
            t = jnp.dot(xc, wxT, preferred_element_type=jnp.float32)   # (H, H)
            # Row (y) contraction; keep MXU in the compute dtype.
            oc = jnp.dot(wy, t.astype(xc.dtype),
                         preferred_element_type=jnp.float32)           # (H, H)
            out_ref[b, ci] = oc.astype(out_ref.dtype)     # dense (H, H) tile store
        return carry

    lax.fori_loop(0, block_n, body, None, unroll=True)


# ------------------------------- glue (JAX) -------------------------------- #
def _grids(n, h, pad, key):
    """Normalized sample coordinates, reproducing the torch arithmetic in f32."""
    hp = h + 2 * pad
    eps = 1.0 / hp
    arange = jnp.linspace(-1.0 + eps, 1.0 - eps, hp, dtype=jnp.float32)[:h]  # (H,)
    # torch.randint(0, 2*pad+1, (n,1,1,2)) * 2/(h+2*pad)
    # (different RNG stream than torch, same distribution/semantics)
    shift = jax.random.randint(key, (n, 2), 0, 2 * pad + 1).astype(jnp.float32)
    shift = shift * jnp.float32(2.0 / hp)
    gx = arange[None, :] + shift[:, 0:1]     # (N, H)  x-coords (grid[..., 0])
    gy = arange[None, :] + shift[:, 1:2]     # (N, H)  y-coords (grid[..., 1])
    return gx, gy


def _folded_bilinear_weights(g, h, pad):
    """g: (N, H) normalized coords -> (N, H, H) bilinear weights with both
    grid_sample(padding_mode='zeros', align_corners=False) and the replicate
    pad folded in (tap index in padded coords is clamped back to the raw image;
    taps outside the padded image get weight zero)."""
    hp = h + 2 * pad
    ix = ((g + 1.0) * hp - 1.0) * 0.5        # unnormalize (align_corners=False)
    i0f = jnp.floor(ix)
    frac = ix - i0f
    i0 = i0f.astype(jnp.int32)
    i1 = i0 + 1

    def tap(i, w):
        valid = (i >= 0) & (i < hp)          # grid_sample padding_mode='zeros'
        src = jnp.clip(i - pad, 0, h - 1)    # fold F.pad(..., 'replicate')
        return (jnp.where(valid, w, 0.0)[..., None]
                * jax.nn.one_hot(src, h, dtype=g.dtype))

    return tap(i0, 1.0 - frac) + tap(i1, frac)       # (N, H, H)


def _bilinear_weights_zeros(g, size):
    """Unfolded weights over the *padded* image (used only by the reference)."""
    ix = ((g + 1.0) * size - 1.0) * 0.5
    i0f = jnp.floor(ix)
    frac = ix - i0f
    i0 = i0f.astype(jnp.int32)
    i1 = i0 + 1
    # one_hot returns an all-zero row for out-of-range indices, which implements
    # padding_mode='zeros' exactly.
    return ((1.0 - frac)[..., None] * jax.nn.one_hot(i0, size, dtype=g.dtype)
            + frac[..., None] * jax.nn.one_hot(i1, size, dtype=g.dtype))


def _pick_block_n(n, max_b=8):
    """Largest divisor of n (<= max_b) that still leaves >= 2 grid steps."""
    best = 1
    for b in range(1, min(n, max_b) + 1):
        if n % b == 0 and n // b >= 2:
            best = b
    return best


def random_shifts_aug(x, key, pad, *, block_n=None, compute_dtype=None):
    """Pallas implementation of RandomShiftsAug.forward.  x: (N, C, H, W)."""
    n, c, h, w = x.shape
    assert h == w

    # Weights built in float32 regardless of x.dtype (coordinate arithmetic at
    # H~84 is not representable in bf16), then cast only for the matmul.
    gx, gy = _grids(n, h, pad, key)
    wy = _folded_bilinear_weights(gy, h, pad)          # (N, H, H) f32
    wx = _folded_bilinear_weights(gx, h, pad)          # (N, H, W) f32
    wxT = jnp.swapaxes(wx, 1, 2)                       # (N, W, H)

    cdt = compute_dtype if compute_dtype is not None else x.dtype
    xk = x.astype(cdt)
    wy = wy.astype(cdt)
    wxT = wxT.astype(cdt)

    if block_n is None:
        block_n = _pick_block_n(n)
    assert n % block_n == 0
    grid = (n // block_n,)

    kernel = functools.partial(_resample_kernel, block_n=block_n, c=c)
    out = pl.pallas_call(
        kernel,
        out_shape=jax.ShapeDtypeStruct((n, c, h, h), x.dtype),
        grid=grid,
        in_specs=[
            pl.BlockSpec((block_n, c, h, w), lambda i: (i, 0, 0, 0)),
            pl.BlockSpec((block_n, h, h), lambda i: (i, 0, 0)),
            pl.BlockSpec((block_n, w, h), lambda i: (i, 0, 0)),
        ],
        out_specs=pl.BlockSpec((block_n, c, h, h), lambda i: (i, 0, 0, 0)),
        compiler_params=pltpu.CompilerParams(dimension_semantics=("parallel",)),
    )(xk, wy, wxT)
    # TODO(synk): with W=84 (< 128 lanes) the per-tile stores are masked; a
    # lane-dense output layout would need an extra HBM transpose pass, which
    # costs more than the masked stores for this memory-bound op.
    return out


def _reference(x, key, pad):
    """Pure-JAX reference of the same op using the *unfolded* formulation
    (explicit replicate pad + zeros-padded bilinear weights + einsum)."""
    n, c, h, w = x.shape
    hp = h + 2 * pad
    gx, gy = _grids(n, h, pad, key)
    wy = _bilinear_weights_zeros(gy, hp)               # (N, H, Hp)
    wx = _bilinear_weights_zeros(gx, hp)               # (N, H, Hp)
    xp = jnp.pad(x.astype(jnp.float32),
                 ((0, 0), (0, 0), (pad, pad), (pad, pad)), mode="edge")
    out = jnp.einsum("nyj,ncji,nxi->ncyx", wy, xp, wx)
    return out.astype(x.dtype)


# --------------------------------- demo ------------------------------------ #
if __name__ == "__main__":
    key = jax.random.PRNGKey(0)
    k_x, k_shift = jax.random.split(key)

    N, C, H, W = 2, 4, 16, 16
    PAD = 4
    x = jax.random.normal(k_x, (N, C, H, W), dtype=jnp.float32)

    # f32 compute path: must match the unfolded reference tightly.
    out = jax.block_until_ready(random_shifts_aug(x, k_shift, PAD))
    ref = jax.block_until_ready(_reference(x, k_shift, PAD))

    assert out.shape == (N, C, H, W), out.shape
    err = float(jnp.max(jnp.abs(out - ref)))
    assert err < 1e-5, err

    # bf16 MXU fast path (f32 accumulation): loose tolerance vs f32 reference.
    out_bf16 = jax.block_until_ready(
        random_shifts_aug(x, k_shift, PAD, compute_dtype=jnp.bfloat16))
    err_bf16 = float(jnp.max(jnp.abs(out_bf16 - ref)))
    assert out_bf16.shape == (N, C, H, W)
    assert err_bf16 < 0.15, err_bf16

    print("KERNEL_OK")
</pallas_src>

<mosaic_0001>
module attributes {stable_mosaic.version = 11 : i64} {
  func.func @_resample_kernel(%arg0: i32, %arg1: memref<1x4x16x16xf32, #tpu.memory_space<vmem>>, %arg2: memref<1x16x16xf32, #tpu.memory_space<vmem>>, %arg3: memref<1x16x16xf32, #tpu.memory_space<vmem>>, %arg4: memref<1x4x16x16xf32, #tpu.memory_space<vmem>>) attributes {dimension_semantics = [#tpu.dimension_semantics<parallel>], iteration_bounds = array<i64: 2>, scalar_prefetch = 0 : i64, scratch_operands = 0 : i64, tpu.core_type = #tpu.core_type<tc>, window_params = [{transform_indices = @transform_0, window_bounds = array<i64: 1, 4, 16, 16>}, {transform_indices = @transform_1, window_bounds = array<i64: 1, 16, 16>}, {transform_indices = @transform_2, window_bounds = array<i64: 1, 16, 16>}, {transform_indices = @transform_3, window_bounds = array<i64: 1, 4, 16, 16>}]} {
    %c0_i32 = arith.constant 0 : i32
    %0 = arith.index_cast %c0_i32 : i32 to index
    %c0 = arith.constant 0 : index
    %c0_0 = arith.constant 0 : index
    %1 = vector.load %arg2[%0, %c0, %c0_0] : memref<1x16x16xf32, #tpu.memory_space<vmem>>, vector<1x16x16xf32>
    %2 = vector.shape_cast %1 : vector<1x16x16xf32> to vector<16x16xf32>
    %3 = arith.index_cast %c0_i32 : i32 to index
    %c0_1 = arith.constant 0 : index
    %c0_2 = arith.constant 0 : index
    %4 = vector.load %arg3[%3, %c0_1, %c0_2] : memref<1x16x16xf32, #tpu.memory_space<vmem>>, vector<1x16x16xf32>
    %5 = vector.shape_cast %4 : vector<1x16x16xf32> to vector<16x16xf32>
    %6 = arith.index_cast %c0_i32 : i32 to index
    %c0_3 = arith.constant 0 : index
    %c0_4 = arith.constant 0 : index
    %c0_5 = arith.constant 0 : index
    %7 = vector.load %arg1[%6, %c0_3, %c0_4, %c0_5] : memref<1x4x16x16xf32, #tpu.memory_space<vmem>>, vector<1x1x16x16xf32>
    %8 = vector.shape_cast %7 : vector<1x1x16x16xf32> to vector<16x16xf32>
    %cst = arith.constant dense<0.000000e+00> : vector<16x16xf32>
    %9 = tpu.matmul %8, %5, %cst {dimension_numbers = #tpu.dot_dimension_numbers<[1], [0], [0], [1], [0, 0, 1, 1], [], []>} : vector<16x16xf32>, vector<16x16xf32>, vector<16x16xf32> -> vector<16x16xf32>
    %cst_6 = arith.constant dense<0.000000e+00> : vector<16x16xf32>
    %10 = tpu.matmul %2, %9, %cst_6 {dimension_numbers = #tpu.dot_dimension_numbers<[1], [0], [0], [1], [0, 0, 1, 1], [], []>} : vector<16x16xf32>, vector<16x16xf32>, vector<16x16xf32> -> vector<16x16xf32>
    %11 = arith.index_cast %c0_i32 : i32 to index
    %c0_7 = arith.constant 0 : index
    %c0_8 = arith.constant 0 : index
    %c0_9 = arith.constant 0 : index
    %12 = vector.load %arg4[%11, %c0_7, %c0_8, %c0_9] : memref<1x4x16x16xf32, #tpu.memory_space<vmem>>, vector<1x1x16x16xf32>
    %13 = vector.shape_cast %12 : vector<1x1x16x16xf32> to vector<16x16xf32>
    %14 = vector.shape_cast %10 : vector<16x16xf32> to vector<1x1x16x16xf32>
    tpu.vector_store %arg4[%11, %c0_7, %c0_8, %c0_9], %14 {strides = array<i32>} : memref<1x4x16x16xf32, #tpu.memory_space<vmem>>, vector<1x1x16x16xf32>,
    %15 = arith.index_cast %c0_i32 : i32 to index
    %c1 = arith.constant 1 : index
    %c0_10 = arith.constant 0 : index
    %c0_11 = arith.constant 0 : index
    %16 = vector.load %arg1[%15, %c1, %c0_10, %c0_11] : memref<1x4x16x16xf32, #tpu.memory_space<vmem>>, vector<1x1x16x16xf32>
    %17 = vector.shape_cast %16 : vector<1x1x16x16xf32> to vector<16x16xf32>
    %cst_12 = arith.constant dense<0.000000e+00> : vector<16x16xf32>
    %18 = tpu.matmul %17, %5, %cst_12 {dimension_numbers = #tpu.dot_dimension_numbers<[1], [0], [0], [1], [0, 0, 1, 1], [], []>} : vector<16x16xf32>, vector<16x16xf32>, vector<16x16xf32> -> vector<16x16xf32>
    %cst_13 = arith.constant dense<0.000000e+00> : vector<16x16xf32>
    %19 = tpu.matmul %2, %18, %cst_13 {dimension_numbers = #tpu.dot_dimension_numbers<[1], [0], [0], [1], [0, 0, 1, 1], [], []>} : vector<16x16xf32>, vector<16x16xf32>, vector<16x16xf32> -> vector<16x16xf32>
    %20 = arith.index_cast %c0_i32 : i32 to index
    %c1_14 = arith.constant 1 : index
    %c0_15 = arith.constant 0 : index
    %c0_16 = arith.constant 0 : index
    %21 = vector.load %arg4[%20, %c1_14, %c0_15, %c0_16] : memref<1x4x16x16xf32, #tpu.memory_space<vmem>>, vector<1x1x16x16xf32>
    %22 = vector.shape_cast %21 : vector<1x1x16x16xf32> to vector<16x16xf32>
    %23 = vector.shape_cast %19 : vector<16x16xf32> to vector<1x1x16x16xf32>
    tpu.vector_store %arg4[%20, %c1_14, %c0_15, %c0_16], %23 {strides = array<i32>} : memref<1x4x16x16xf32, #tpu.memory_space<vmem>>, vector<1x1x16x16xf32>,
    %24 = arith.index_cast %c0_i32 : i32 to index
    %c2 = arith.constant 2 : index
    %c0_17 = arith.constant 0 : index
    %c0_18 = arith.constant 0 : index
    %25 = vector.load %arg1[%24, %c2, %c0_17, %c0_18] : memref<1x4x16x16xf32, #tpu.memory_space<vmem>>, vector<1x1x16x16xf32>
    %26 = vector.shape_cast %25 : vector<1x1x16x16xf32> to vector<16x16xf32>
    %cst_19 = arith.constant dense<0.000000e+00> : vector<16x16xf32>
    %27 = tpu.matmul %26, %5, %cst_19 {dimension_numbers = #tpu.dot_dimension_numbers<[1], [0], [0], [1], [0, 0, 1, 1], [], []>} : vector<16x16xf32>, vector<16x16xf32>, vector<16x16xf32> -> vector<16x16xf32>
    %cst_20 = arith.constant dense<0.000000e+00> : vector<16x16xf32>
    %28 = tpu.matmul %2, %27, %cst_20 {dimension_numbers = #tpu.dot_dimension_numbers<[1], [0], [0], [1], [0, 0, 1, 1], [], []>} : vector<16x16xf32>, vector<16x16xf32>, vector<16x16xf32> -> vector<16x16xf32>
    %29 = arith.index_cast %c0_i32 : i32 to index
    %c2_21 = arith.constant 2 : index
    %c0_22 = arith.constant 0 : index
    %c0_23 = arith.constant 0 : index
    %30 = vector.load %arg4[%29, %c2_21, %c0_22, %c0_23] : memref<1x4x16x16xf32, #tpu.memory_space<vmem>>, vector<1x1x16x16xf32>
    %31 = vector.shape_cast %30 : vector<1x1x16x16xf32> to vector<16x16xf32>
    %32 = vector.shape_cast %28 : vector<16x16xf32> to vector<1x1x16x16xf32>
    tpu.vector_store %arg4[%29, %c2_21, %c0_22, %c0_23], %32 {strides = array<i32>} : memref<1x4x16x16xf32, #tpu.memory_space<vmem>>, vector<1x1x16x16xf32>,
    %33 = arith.index_cast %c0_i32 : i32 to index
    %c3 = arith.constant 3 : index
    %c0_24 = arith.constant 0 : index
    %c0_25 = arith.constant 0 : index
    %34 = vector.load %arg1[%33, %c3, %c0_24, %c0_25] : memref<1x4x16x16xf32, #tpu.memory_space<vmem>>, vector<1x1x16x16xf32>
    %35 = vector.shape_cast %34 : vector<1x1x16x16xf32> to vector<16x16xf32>
    %cst_26 = arith.constant dense<0.000000e+00> : vector<16x16xf32>
    %36 = tpu.matmul %35, %5, %cst_26 {dimension_numbers = #tpu.dot_dimension_numbers<[1], [0], [0], [1], [0, 0, 1, 1], [], []>} : vector<16x16xf32>, vector<16x16xf32>, vector<16x16xf32> -> vector<16x16xf32>
    %cst_27 = arith.constant dense<0.000000e+00> : vector<16x16xf32>
    %37 = tpu.matmul %2, %36, %cst_27 {dimension_numbers = #tpu.dot_dimension_numbers<[1], [0], [0], [1], [0, 0, 1, 1], [], []>} : vector<16x16xf32>, vector<16x16xf32>, vector<16x16xf32> -> vector<16x16xf32>
    %38 = arith.index_cast %c0_i32 : i32 to index
    %c3_28 = arith.constant 3 : index
    %c0_29 = arith.constant 0 : index
    %c0_30 = arith.constant 0 : index
    %39 = vector.load %arg4[%38, %c3_28, %c0_29, %c0_30] : memref<1x4x16x16xf32, #tpu.memory_space<vmem>>, vector<1x1x16x16xf32>
    %40 = vector.shape_cast %39 : vector<1x1x16x16xf32> to vector<16x16xf32>
    %41 = vector.shape_cast %37 : vector<16x16xf32> to vector<1x1x16x16xf32>
    tpu.vector_store %arg4[%38, %c3_28, %c0_29, %c0_30], %41 {strides = array<i32>} : memref<1x4x16x16xf32, #tpu.memory_space<vmem>>, vector<1x1x16x16xf32>,
    %c1_i32 = arith.constant 1 : i32
    return
  }
  func.func @transform_0(%arg0: i32) -> (i32, i32, i32, i32) {
    %c0_i32 = arith.constant 0 : i32
    %c0_i32_0 = arith.constant 0 : i32
    %c0_i32_1 = arith.constant 0 : i32
    %c0_i32_2 = arith.constant 0 : i32
    return %arg0, %c0_i32, %c0_i32_0, %c0_i32_1 : i32, i32, i32, i32
  }
  func.func @transform_1(%arg0: i32) -> (i32, i32, i32) {
    %c0_i32 = arith.constant 0 : i32
    %c0_i32_0 = arith.constant 0 : i32
    %c0_i32_1 = arith.constant 0 : i32
    return %arg0, %c0_i32, %c0_i32_0 : i32, i32, i32
  }
  func.func @transform_2(%arg0: i32) -> (i32, i32, i32) {
    %c0_i32 = arith.constant 0 : i32
    %c0_i32_0 = arith.constant 0 : i32
    %c0_i32_1 = arith.constant 0 : i32
    return %arg0, %c0_i32, %c0_i32_0 : i32, i32, i32
  }
  func.func @transform_3(%arg0: i32) -> (i32, i32, i32, i32) {
    %c0_i32 = arith.constant 0 : i32
    %c0_i32_0 = arith.constant 0 : i32
    %c0_i32_1 = arith.constant 0 : i32
    %c0_i32_2 = arith.constant 0 : i32
    return %arg0, %c0_i32, %c0_i32_0, %c0_i32_1 : i32, i32, i32, i32
  }
}

</mosaic_0001>

<llo_original>
// kernel: tpu_custom_call.1
$region0: #{tpu_custom_call.1}
  #allocation0 [shape = 'u32[]', space=smem, size = 0x4, offset = 0x4, fixed_abs, tag = 'smem constant byte address 0x4 - core index']
  #allocation1 [shape = 'u32[144,128]{1,0:T(1,128)}', space=vmem, size = 0x12000, scoped, tag = 'internal scratch']
  %s0 = inlined_call_operand.hbm [shape: f32[2,4,16,16], index: 0, kind: input, shape index: {}]
  %s1 = inlined_call_operand.hbm [shape: f32[2,16,16], index: 1, kind: input, shape index: {}]
  %s2 = inlined_call_operand.hbm [shape: f32[2,16,16], index: 2, kind: input, shape index: {}]
  %s3 = inlined_call_operand.hbm [shape: f32[2,4,16,16], index: 3, kind: output, shape index: {}]
  %s4 = sld [smem:[#allocation0]]
  $region57: #{tpu_custom_call.1} parent=0
    _
  %s6 = ssub.s32 1, %s4
  %s7 = scalar_select 0, %s6, %s4
  $region1: #{tpu_custom_call.1} parent=0
    #allocation2 [shape = 'u8[65536]{0}', space=vmem, size = 0x10000, scoped, tag = 'input window, operand 0']
    #allocation3 [shape = 's32[2]{0}', space=sflag, size = 0x8, scoped, tag = 'scoped memory for tpu_custom_call.1']
    #allocation4 [shape = 's32[2]{0}', space=sflag, size = 0x8, scoped, tag = 'scoped memory for tpu_custom_call.1']
    #allocation5 [shape = 'u8[16384]{0}', space=vmem, size = 0x4000, scoped, tag = 'input window, operand 1']
    #allocation6 [shape = 's32[2]{0}', space=sflag, size = 0x8, scoped, tag = 'scoped memory for tpu_custom_call.1']
    #allocation7 [shape = 'u8[16384]{0}', space=vmem, size = 0x4000, scoped, tag = 'input window, operand 2']
    #allocation8 [shape = 'u8[65536]{0}', space=vmem, size = 0x10000, scoped, tag = 'output window, operand 0']
    %8 = vsyncpa [#allocation3], 0
    %s9 = scalar_lea.sflag [#allocation3], 1
    %10 = vsyncpa %s9, 0
    %11 = vsyncpa [#allocation6], 0
    %s12 = scalar_lea.sflag [#allocation6], 1
    %13 = vsyncpa %s12, 0
    %14 = vsyncpa [#allocation4], 0
    %s15 = scalar_lea.sflag [#allocation4], 1
    %16 = vsyncpa %s15, 0
    loop: start=0, step=1, limit=4
    $region2: #{tpu_custom_call.1} parent=1 // loop_pre_header
      _
    $region3: #{tpu_custom_call.1} parent=1 // loop_header
      %s18 = sphi 0, %s22
      %p19 = scmp.ge.s32.totalorder %s18, 4
      %s28 = sphi 0, %s30
      %s31 = sphi 0, %s28
      %s32 = sphi 0, %s31
      %s48 = sphi 0, %s32
      %s54 = sphi 0, %s56
      %s57 = sphi 0, %s54
      %s58 = sphi 0, %s57
      %s74 = sphi 0, %s58
      %s80 = sphi 0, %s82
      %s83 = sphi 0, %s80
      %s84 = sphi 0, %s83
      %s100 = sphi 0, %s84
      %s106 = sphi 0, %s108
      %s109 = sphi 0, %s106
      %s110 = sphi 0, %s109
      %s126 = sphi 0, %s110
    $region4: #{tpu_custom_call.1} parent=1 // loop_header_branch
      %21 = sbr.rel (%p19) target = $region8
    $region5: #{tpu_custom_call.1} parent=1 // loop_body
      %s23 = ssub.s32 %s18, 1
      %s24 = ssub.s32 %s18, 2
      %s25 = sadd.s32 %s18, 1
      %s26 = ssub.s32 %s18, %s25
      %p27 = scmp.eq.s32.totalorder %s26, 0
      %s29 = sadd.s32 %s28, 1
      %s30 = scalar_select %p27, %s28, %s29
      %p33 = pneg %p27
      %p34 = scmp.eq.s32.totalorder %s18, 1
      %p35 = por %p33, %p34
      %p36 = scmp.ne.s32.totalorder %s28, %s31
      %p37 = scmp.eq.s32.totalorder %s18, 0
      %p38 = por %p36, %p37
      %p39 = scmp.ne.s32.totalorder %s28, %s31
      %p40 = scmp.eq.s32.totalorder %s23, 1
      %p41 = por %p39, %p40
      %p42 = scmp.ne.s32.totalorder %s31, %s32
      %p43 = scmp.eq.s32.totalorder %s23, 0
      %p44 = por %p42, %p43
      %p45 = scmp.ne.s32.totalorder %s31, %s32
      %p46 = scmp.eq.s32.totalorder %s24, 1
      %p47 = por %p45, %p46
      %p49 = scmp.ne.s32.totalorder %s32, %s48
      %p50 = scmp.eq.s32.totalorder %s24, 0
      %p51 = por %p49, %p50
      %s52 = ssub.s32 %s18, %s25
      %p53 = scmp.eq.s32.totalorder %s52, 0
      %s55 = sadd.s32 %s54, 1
      %s56 = scalar_select %p53, %s54, %s55
      %p59 = pneg %p53
      %p60 = scmp.eq.s32.totalorder %s18, 1
      %p61 = por %p59, %p60
      %p62 = scmp.ne.s32.totalorder %s54, %s57
      %p63 = scmp.eq.s32.totalorder %s18, 0
      %p64 = por %p62, %p63
      %p65 = scmp.ne.s32.totalorder %s54, %s57
      %p66 = scmp.eq.s32.totalorder %s23, 1
      %p67 = por %p65, %p66
      %p68 = scmp.ne.s32.totalorder %s57, %s58
      %p69 = scmp.eq.s32.totalorder %s23, 0
      %p70 = por %p68, %p69
      %p71 = scmp.ne.s32.totalorder %s57, %s58
      %p72 = scmp.eq.s32.totalorder %s24, 1
      %p73 = por %p71, %p72
      %p75 = scmp.ne.s32.totalorder %s58, %s74
      %p76 = scmp.eq.s32.totalorder %s24, 0
      %p77 = por %p75, %p76
      %s78 = ssub.s32 %s18, %s25
      %p79 = scmp.eq.s32.totalorder %s78, 0
      %s81 = sadd.s32 %s80, 1
      %s82 = scalar_select %p79, %s80, %s81
      %p85 = pneg %p79
      %p86 = scmp.eq.s32.totalorder %s18, 1
      %p87 = por %p85, %p86
      %p88 = scmp.ne.s32.totalorder %s80, %s83
      %p89 = scmp.eq.s32.totalorder %s18, 0
      %p90 = por %p88, %p89
      %p91 = scmp.ne.s32.totalorder %s80, %s83
      %p92 = scmp.eq.s32.totalorder %s23, 1
      %p93 = por %p91, %p92
      %p94 = scmp.ne.s32.totalorder %s83, %s84
      %p95 = scmp.eq.s32.totalorder %s23, 0
      %p96 = por %p94, %p95
      %p97 = scmp.ne.s32.totalorder %s83, %s84
      %p98 = scmp.eq.s32.totalorder %s24, 1
      %p99 = por %p97, %p98
      %p101 = scmp.ne.s32.totalorder %s84, %s100
      %p102 = scmp.eq.s32.totalorder %s24, 0
      %p103 = por %p101, %p102
      %s104 = ssub.s32 %s18, %s25
      %p105 = scmp.eq.s32.totalorder %s104, 0
      %s107 = sadd.s32 %s106, 1
      %s108 = scalar_select %p105, %s106, %s107
      %p111 = pneg %p105
      %p112 = scmp.eq.s32.totalorder %s18, 1
      %p113 = por %p111, %p112
      %p114 = scmp.ne.s32.totalorder %s106, %s109
      %p115 = scmp.eq.s32.totalorder %s18, 0
      %p116 = por %p114, %p115
      %p117 = scmp.ne.s32.totalorder %s106, %s109
      %p118 = scmp.eq.s32.totalorder %s23, 1
      %p119 = por %p117, %p118
      %p120 = scmp.ne.s32.totalorder %s109, %s110
      %p121 = scmp.eq.s32.totalorder %s23, 0
      %p122 = por %p120, %p121
      %p123 = scmp.ne.s32.totalorder %s109, %s110
      %p124 = scmp.eq.s32.totalorder %s24, 1
      %p125 = por %p123, %p124
      %p127 = scmp.ne.s32.totalorder %s110, %s126
      %p128 = scmp.eq.s32.totalorder %s24, 0
      %p129 = por %p127, %p128
      %p130 = scmp.le.s32.totalorder 1, %s18
      %p131 = scmp.lt.s32.totalorder %s18, 3
      %p132 = pnand %p130, %p131
      %p133 = pneg %p132
      // Predicated region
      $region9: #{tpu_custom_call.1} parent=5 // pred_check
        _
      $region10: #{tpu_custom_call.1} parent=5 // pred_check_branch
        %135 = sbr.rel (%p132) target = $region12
      $region11: #{tpu_custom_call.1} parent=5 // pred_region
        %s136 = ssub.s32 %s18, 1
      $region12: #{tpu_custom_call.1} parent=5 // pred_fallthru
        _
      %p137 = scmp.lt.s32.totalorder %s18, 2
      // Predicated region
      $region13: #{tpu_custom_call.1} parent=5 // pred_check
        %p138 = pneg %p137
      $region14: #{tpu_custom_call.1} parent=5 // pred_check_branch
        %140 = sbr.rel (%p138) target = $region16
      $region15: #{tpu_custom_call.1} parent=5 // pred_region
        // Predicated region
        $region17: #{tpu_custom_call.1} parent=15 // pred_check
          %p141 = pneg %p38
        $region18: #{tpu_custom_call.1} parent=15 // pred_check_branch
          %143 = sbr.rel (%p141) target = $region20
        $region19: #{tpu_custom_call.1} parent=15 // pred_region
          %s144 = sand.u32 %s28, 1
          %s145 = scalar_lea.sflag [#allocation3], %s144
          %s146 = sand.u32 %s28, 1
          %s147 = smul.addr %s146, 64
          %s148 = scalar_lea.vmem [#allocation2], %s147
          %s150 = ssub.s32 1024, 1024
          %151 = vsyncadd %s145, %s150
          %s152 = smul.addr %s18, 8
          %s153 = smul.addr %s152, 128
          %s154 = scalar_lea.hbm %s0, %s153
          %s155 = sshll.u32 %s148, 4
          %s156 = int_to_ptr.vmem [resolvable:$true] %s155
          %161 = dma.hbm_to_vmem [thread:$0]  %s154, 1024, %s156, %s145, 128, 128, 8
        $region20: #{tpu_custom_call.1} parent=15 // pred_fallthru
          _
        // Predicated region
        $region21: #{tpu_custom_call.1} parent=15 // pred_check
          %p162 = pneg %p64
        $region22: #{tpu_custom_call.1} parent=15 // pred_check_branch
          %164 = sbr.rel (%p162) target = $region24
        $region23: #{tpu_custom_call.1} parent=15 // pred_region
          %s165 = sand.u32 %s18, 1
          %s166 = scalar_lea.sflag [#allocation6], %s165
          %s167 = sand.u32 %s54, 1
          %s168 = smul.addr %s167, 16
          %s169 = scalar_lea.vmem [#allocation5], %s168
          %s171 = ssub.s32 256, 256
          %172 = vsyncadd %s166, %s171
          %s173 = smul.addr %s18, 2
          %s174 = smul.addr %s173, 128
          %s175 = scalar_lea.hbm %s1, %s174
          %s176 = sshll.u32 %s169, 4
          %s177 = int_to_ptr.vmem [resolvable:$true] %s176
          %182 = dma.hbm_to_vmem [thread:$0]  %s175, 256, %s177, %s166, 128, 128, 8
        $region24: #{tpu_custom_call.1} parent=15 // pred_fallthru
          _
        // Predicated region
        $region25: #{tpu_custom_call.1} parent=15 // pred_check
          %p183 = pneg %p90
        $region26: #{tpu_custom_call.1} parent=15 // pred_check_branch
          %185 = sbr.rel (%p183) target = $region28
        $region27: #{tpu_custom_call.1} parent=15 // pred_region
          %s186 = sand.u32 %s18, 1
          %s187 = scalar_lea.sflag [#allocation6], %s186
          %s188 = sand.u32 %s80, 1
          %s189 = smul.addr %s188, 16
          %s190 = scalar_lea.vmem [#allocation7], %s189
          %s192 = ssub.s32 256, 256
          %193 = vsyncadd %s187, %s192
          %s194 = smul.addr %s18, 2
          %s195 = smul.addr %s194, 128
          %s196 = scalar_lea.hbm %s2, %s195
          %s197 = sshll.u32 %s190, 4
          %s198 = int_to_ptr.vmem [resolvable:$true] %s197
          %203 = dma.hbm_to_vmem [thread:$0]  %s196, 256, %s198, %s187, 128, 128, 8
        $region28: #{tpu_custom_call.1} parent=15 // pred_fallthru
          _
      $region16: #{tpu_custom_call.1} parent=5 // pred_fallthru
        _
      %p204 = scmp.le.s32.totalorder 1, %s18
      %p205 = scmp.lt.s32.totalorder %s18, 3
      %p206 = pnand %p204, %p205
      %p207 = pneg %p206
      // Predicated region
      $region29: #{tpu_custom_call.1} parent=5 // pred_check
        _
      $region30: #{tpu_custom_call.1} parent=5 // pred_check_branch
        %209 = sbr.rel (%p206) target = $region32
      $region31: #{tpu_custom_call.1} parent=5 // pred_region
        %s210 = ssub.s32 %s18, 1
        %s211 = sand.u32 %s31, 1
        %s212 = scalar_lea.sflag [#allocation3], %s211
        %s213 = sand.u32 %s31, 1
        %s214 = smul.addr %s213, 64
        %s215 = scalar_lea.vmem [#allocation2], %s214
        // Predicated region
        $region33: #{tpu_custom_call.1} parent=31 // pred_check
          %p216 = pneg %p44
        $region34: #{tpu_custom_call.1} parent=31 // pred_check_branch
          %218 = sbr.rel (%p216) target = $region36
        $region35: #{tpu_custom_call.1} parent=31 // pred_region
          %219 = dma.done %s212, 1024
        $region36: #{tpu_custom_call.1} parent=31 // pred_fallthru
          _
        %s220 = sand.u32 %s23, 1
        %s221 = scalar_lea.sflag [#allocation6], %s220
        %s222 = sand.u32 %s57, 1
        %s223 = smul.addr %s222, 16
        %s224 = scalar_lea.vmem [#allocation5], %s223
        // Predicated region
        $region37: #{tpu_custom_call.1} parent=31 // pred_check
          %p225 = pneg %p70
        $region38: #{tpu_custom_call.1} parent=31 // pred_check_branch
          %227 = sbr.rel (%p225) target = $region40
        $region39: #{tpu_custom_call.1} parent=31 // pred_region
          %228 = dma.done %s221, 256
        $region40: #{tpu_custom_call.1} parent=31 // pred_fallthru
          _
        %s229 = sand.u32 %s23, 1
        %s230 = scalar_lea.sflag [#allocation6], %s229
        %s231 = sand.u32 %s83, 1
        %s232 = smul.addr %s231, 16
        %s233 = scalar_lea.vmem [#allocation7], %s232
        // Predicated region
        $region41: #{tpu_custom_call.1} parent=31 // pred_check
          %p234 = pneg %p96
        $region42: #{tpu_custom_call.1} parent=31 // pred_check_branch
          %236 = sbr.rel (%p234) target = $region44
        $region43: #{tpu_custom_call.1} parent=31 // pred_region
          %237 = dma.done %s230, 256
        $region44: #{tpu_custom_call.1} parent=31 // pred_fallthru
          _
        %s238 = sand.u32 %s31, 1
        %s239 = scalar_lea.sflag [#allocation3], %s238
        %s240 = sand.u32 %s31, 1
        %s241 = smul.addr %s240, 64
        %s242 = scalar_lea.vmem [#allocation2], %s241
        %p243 = pneg %p44
        %p244 = pneg %p41
        %s245 = sand.u32 %s23, 1
        %s246 = scalar_lea.sflag [#allocation6], %s245
        %s247 = sand.u32 %s57, 1
        %s248 = smul.addr %s247, 16
        %s249 = scalar_lea.vmem [#allocation5], %s248
        %p250 = pneg %p70
        %p251 = pneg %p67
        %s252 = sand.u32 %s23, 1
        %s253 = scalar_lea.sflag [#allocation6], %s252
        %s254 = sand.u32 %s83, 1
        %s255 = smul.addr %s254, 16
        %s256 = scalar_lea.vmem [#allocation7], %s255
        %p257 = pneg %p96
        %p258 = pneg %p93
        %p259 = pneg %p122
        %p260 = pneg %p119
        %s261 = sand.u32 %s109, 1
        %s262 = scalar_lea.sflag [#allocation4], %s261
        %s263 = sand.u32 %s109, 1
        %s264 = smul.addr %s263, 64
        %s265 = scalar_lea.vmem [#allocation8], %s264
        %v266 = vld [vmem:[%s224] sm:$0xff]
        %v267 = vld [vmem:[%s224 + $0x8] sm:$0xff]
        %v268 = vld [vmem:[%s233] sm:$0xff]
        %v269 = vld [vmem:[%s233 + $0x8] sm:$0xff]
        %v270 = vld [vmem:[%s215] sm:$0xff]
        %v271 = vld [vmem:[%s215 + $0x8] sm:$0xff]
        %vm272 = vcmask 130048
        %v274 = vsel %vm272, %v270, 0
        %v277 = vsel %vm272, %v271, 0
        %279 = vmatprep.subr.mxu0 0.0
        %280 = vmatpush1.msra.mxu0 %v268
        %281 = vmatprep.subr.mxu0 0.0
        %282 = vmatpush1.msra.mxu0 %v269
        %283 = vmatprep.subr.mxu0 0.0
        %284 = vmatpush1.msra.mxu0 0.0
        %285 = vmatprep.subr.mxu0 0.0
        %286 = vmatpush1.msra.mxu0 0.0
        %287 = vmatprep.subr.mxu0 0.0
        %288 = vmatpush1.msra.mxu0 0.0
        %289 = vmatprep.subr.mxu0 0.0
        %290 = vmatpush1.msra.mxu0 0.0
        %291 = vmatprep.subr.mxu0 0.0
        %292 = vmatpush1.msra.mxu0 0.0
        %293 = vmatprep.subr.mxu0 0.0
        %294 = vmatpush1.msra.mxu0 0.0
        %295 = vmatprep.subr.mxu0 0.0
        %296 = vmatpush1.msra.mxu0 0.0
        %297 = vmatprep.subr.mxu0 0.0
        %298 = vmatpush1.msra.mxu0 0.0
        %299 = vmatprep.subr.mxu0 0.0
        %300 = vmatpush1.msra.mxu0 0.0
        %301 = vmatprep.subr.mxu0 0.0
        %302 = vmatpush1.msra.mxu0 0.0
        %303 = vmatprep.subr.mxu0 0.0
        %304 = vmatpush1.msra.mxu0 0.0
        %305 = vmatprep.subr.mxu0 0.0
        %306 = vmatpush1.msra.mxu0 0.0
        %307 = vmatprep.subr.mxu0 0.0
        %308 = vmatpush1.msra.mxu0 0.0
        %309 = vmatprep.subr.mxu0 0.0
        %310 = vmatpush1.msra.mxu0 0.0
        %311 = vmatprep.subr.mxu0 0.0
        %312 = vmatpush1.msra.mxu0 0.0
        %313 = vmatprep.subr.mxu0 0.0
        %314 = vmatpush1.msra.mxu0 0.0
        %315 = vmatprep.subr.mxu0 0.0
        %316 = vmatpush1.msra.mxu0 0.0
        %317 = vmatprep.subr.mxu0 0.0
        %318 = vmatpush1.msra.mxu0 0.0
        %319 = vmatprep.subr.mxu0 0.0
        %320 = vmatpush1.msra.mxu0 0.0
        %321 = vmatprep.subr.mxu0 0.0
        %322 = vmatpush1.msra.mxu0 0.0
        %323 = vmatprep.subr.mxu0 0.0
        %324 = vmatpush1.msra.mxu0 0.0
        %325 = vmatprep.subr.mxu0 0.0
        %326 = vmatpush1.msra.mxu0 0.0
        %327 = vmatprep.subr.mxu0 0.0
        %328 = vmatpush1.msra.mxu0 0.0
        %329 = vmatprep.subr.mxu0 0.0
        %330 = vmatpush1.msra.mxu0 0.0
        %331 = vmatprep.subr.mxu0 0.0
        %332 = vmatpush1.msra.mxu0 0.0
        %333 = vmatprep.subr.mxu0 0.0
        %334 = vmatpush1.msra.mxu0 0.0
        %335 = vmatprep.subr.mxu0 0.0
        %336 = vmatpush1.msra.mxu0 0.0
        %337 = vmatprep.subr.mxu0 0.0
        %338 = vmatpush1.msra.mxu0 0.0
        %339 = vmatprep.subr.mxu0 0.0
        %340 = vmatpush1.msra.mxu0 0.0
        %341 = vmatprep.subr.mxu0 0.0
        %342 = vmatpush1.msra.mxu0 0.0
        %343 = vmatprep.mubr.f32.mxu0 0.0
        %344 = vmatmul.mubr.f32.gmra.mrb[0].mxu0 %v274
        %v345 = vpop.f32.mrb[0].mxu0
        %v346 = vadd.f32 0.0, %v345
        %v347 = vpop.f32.mrb[0].mxu0
        %348 = vmatprep.mubr.f32.mxu0 0.0
        %349 = vmatmul.mubr.f32.gmra.mrb[0].mxu0 %v277
        %v350 = vpop.f32.mrb[0].mxu0
        %v351 = vadd.f32 0.0, %v350
        %v352 = vpop.f32.mrb[0].mxu0
        %353 = vdwg.mxu0
        %v355 = vsel %vm272, %v266, 0
        %v358 = vsel %vm272, %v267, 0
        %360 = vmatprep.subr.mxu0 0.0
        %361 = vmatpush1.msra.mxu0 %v346
        %362 = vmatprep.subr.mxu0 0.0
        %363 = vmatpush1.msra.mxu0 %v351
        %364 = vmatprep.subr.mxu0 0.0
        %365 = vmatpush1.msra.mxu0 0.0
        %366 = vmatprep.subr.mxu0 0.0
        %367 = vmatpush1.msra.mxu0 0.0
        %368 = vmatprep.subr.mxu0 0.0
        %369 = vmatpush1.msra.mxu0 0.0
        %370 = vmatprep.subr.mxu0 0.0
        %371 = vmatpush1.msra.mxu0 0.0
        %372 = vmatprep.subr.mxu0 0.0
        %373 = vmatpush1.msra.mxu0 0.0
        %374 = vmatprep.subr.mxu0 0.0
        %375 = vmatpush1.msra.mxu0 0.0
        %376 = vmatprep.subr.mxu0 0.0
        %377 = vmatpush1.msra.mxu0 0.0
        %378 = vmatprep.subr.mxu0 0.0
        %379 = vmatpush1.msra.mxu0 0.0
        %380 = vmatprep.subr.mxu0 0.0
        %381 = vmatpush1.msra.mxu0 0.0
        %382 = vmatprep.subr.mxu0 0.0
        %383 = vmatpush1.msra.mxu0 0.0
        %384 = vmatprep.subr.mxu0 0.0
        %385 = vmatpush1.msra.mxu0 0.0
        %386 = vmatprep.subr.mxu0 0.0
        %387 = vmatpush1.msra.mxu0 0.0
        %388 = vmatprep.subr.mxu0 0.0
        %389 = vmatpush1.msra.mxu0 0.0
        %390 = vmatprep.subr.mxu0 0.0
        %391 = vmatpush1.msra.mxu0 0.0
        %392 = vmatprep.subr.mxu0 0.0
        %393 = vmatpush1.msra.mxu0 0.0
        %394 = vmatprep.subr.mxu0 0.0
        %395 = vmatpush1.msra.mxu0 0.0
        %396 = vmatprep.subr.mxu0 0.0
        %397 = vmatpush1.msra.mxu0 0.0
        %398 = vmatprep.subr.mxu0 0.0
        %399 = vmatpush1.msra.mxu0 0.0
        %400 = vmatprep.subr.mxu0 0.0
        %401 = vmatpush1.msra.mxu0 0.0
        %402 = vmatprep.subr.mxu0 0.0
        %403 = vmatpush1.msra.mxu0 0.0
        %404 = vmatprep.subr.mxu0 0.0
        %405 = vmatpush1.msra.mxu0 0.0
        %406 = vmatprep.subr.mxu0 0.0
        %407 = vmatpush1.msra.mxu0 0.0
        %408 = vmatprep.subr.mxu0 0.0
        %409 = vmatpush1.msra.mxu0 0.0
        %410 = vmatprep.subr.mxu0 0.0
        %411 = vmatpush1.msra.mxu0 0.0
        %412 = vmatprep.subr.mxu0 0.0
        %413 = vmatpush1.msra.mxu0 0.0
        %414 = vmatprep.subr.mxu0 0.0
        %415 = vmatpush1.msra.mxu0 0.0
        %416 = vmatprep.subr.mxu0 0.0
        %417 = vmatpush1.msra.mxu0 0.0
        %418 = vmatprep.subr.mxu0 0.0
        %419 = vmatpush1.msra.mxu0 0.0
        %420 = vmatprep.subr.mxu0 0.0
        %421 = vmatpush1.msra.mxu0 0.0
        %422 = vmatprep.subr.mxu0 0.0
        %423 = vmatpush1.msra.mxu0 0.0
        %424 = vmatprep.mubr.f32.mxu0 0.0
        %425 = vmatmul.mubr.f32.gmra.mrb[0].mxu0 %v355
        %v426 = vpop.f32.mrb[0].mxu0
        %v427 = vadd.f32 0.0, %v426
        %v428 = vpop.f32.mrb[0].mxu0
        %429 = vmatprep.mubr.f32.mxu0 0.0
        %430 = vmatmul.mubr.f32.gmra.mrb[0].mxu0 %v358
        %v431 = vpop.f32.mrb[0].mxu0
        %v432 = vadd.f32 0.0, %v431
        %v433 = vpop.f32.mrb[0].mxu0
        %434 = vdwg.mxu0
        %435 = vst.msk [vmem:[%s265] sm:$0xff] %vm272, %v427
        %436 = vst.msk [vmem:[%s265 + $0x8] sm:$0xff] %vm272, %v432
        %s437 = scalar_lea.vmem %s215, 16 [#allocation2]
        %v438 = vld [vmem:[%s437] sm:$0xff]
        %v439 = vld [vmem:[%s437 + $0x8] sm:$0xff]
        %v441 = vsel %vm272, %v438, 0
        %v444 = vsel %vm272, %v439, 0
        %446 = vmatprep.subr.mxu0 0.0
        %447 = vmatpush1.msra.mxu0 %v268
        %448 = vmatprep.subr.mxu0 0.0
        %449 = vmatpush1.msra.mxu0 %v269
        %450 = vmatprep.subr.mxu0 0.0
        %451 = vmatpush1.msra.mxu0 0.0
        %452 = vmatprep.subr.mxu0 0.0
        %453 = vmatpush1.msra.mxu0 0.0
        %454 = vmatprep.subr.mxu0 0.0
        %455 = vmatpush1.msra.mxu0 0.0
        %456 = vmatprep.subr.mxu0 0.0
        %457 = vmatpush1.msra.mxu0 0.0
        %458 = vmatprep.subr.mxu0 0.0
        %459 = vmatpush1.msra.mxu0 0.0
        %460 = vmatprep.subr.mxu0 0.0
        %461 = vmatpush1.msra.mxu0 0.0
        %462 = vmatprep.subr.mxu0 0.0
        %463 = vmatpush1.msra.mxu0 0.0
        %464 = vmatprep.subr.mxu0 0.0
        %465 = vmatpush1.msra.mxu0 0.0
        %466 = vmatprep.subr.mxu0 0.0
        %467 = vmatpush1.msra.mxu0 0.0
        %468 = vmatprep.subr.mxu0 0.0
        %469 = vmatpush1.msra.mxu0 0.0
        %470 = vmatprep.subr.mxu0 0.0
        %471 = vmatpush1.msra.mxu0 0.0
        %472 = vmatprep.subr.mxu0 0.0
        %473 = vmatpush1.msra.mxu0 0.0
        %474 = vmatprep.subr.mxu0 0.0
        %475 = vmatpush1.msra.mxu0 0.0
        %476 = vmatprep.subr.mxu0 0.0
        %477 = vmatpush1.msra.mxu0 0.0
        %478 = vmatprep.subr.mxu0 0.0
        %479 = vmatpush1.msra.mxu0 0.0
        %480 = vmatprep.subr.mxu0 0.0
        %481 = vmatpush1.msra.mxu0 0.0
        %482 = vmatprep.subr.mxu0 0.0
        %483 = vmatpush1.msra.mxu0 0.0
        %484 = vmatprep.subr.mxu0 0.0
        %485 = vmatpush1.msra.mxu0 0.0
        %486 = vmatprep.subr.mxu0 0.0
        %487 = vmatpush1.msra.mxu0 0.0
        %488 = vmatprep.subr.mxu0 0.0
        %489 = vmatpush1.msra.mxu0 0.0
        %490 = vmatprep.subr.mxu0 0.0
        %491 = vmatpush1.msra.mxu0 0.0
        %492 = vmatprep.subr.mxu0 0.0
        %493 = vmatpush1.msra.mxu0 0.0
        %494 = vmatprep.subr.mxu0 0.0
        %495 = vmatpush1.msra.mxu0 0.0
        %496 = vmatprep.subr.mxu0 0.0
        %497 = vmatpush1.msra.mxu0 0.0
        %498 = vmatprep.subr.mxu0 0.0
        %499 = vmatpush1.msra.mxu0 0.0
        %500 = vmatprep.subr.mxu0 0.0
        %501 = vmatpush1.msra.mxu0 0.0
        %502 = vmatprep.subr.mxu0 0.0
        %503 = vmatpush1.msra.mxu0 0.0
        %504 = vmatprep.subr.mxu0 0.0
        %505 = vmatpush1.msra.mxu0 0.0
        %506 = vmatprep.subr.mxu0 0.0
        %507 = vmatpush1.msra.mxu0 0.0
        %508 = vmatprep.subr.mxu0 0.0
        %509 = vmatpush1.msra.mxu0 0.0
        %510 = vmatprep.mubr.f32.mxu0 0.0
        %511 = vmatmul.mubr.f32.gmra.mrb[0].mxu0 %v441
        %v512 = vpop.f32.mrb[0].mxu0
        %v513 = vadd.f32 0.0, %v512
        %v514 = vpop.f32.mrb[0].mxu0
        %515 = vmatprep.mubr.f32.mxu0 0.0
        %516 = vmatmul.mubr.f32.gmra.mrb[0].mxu0 %v444
        %v517 = vpop.f32.mrb[0].mxu0
        %v518 = vadd.f32 0.0, %v517
        %v519 = vpop.f32.mrb[0].mxu0
        %520 = vdwg.mxu0
        %521 = vmatprep.subr.mxu0 0.0
        %522 = vmatpush1.msra.mxu0 %v513
        %523 = vmatprep.subr.mxu0 0.0
        %524 = vmatpush1.msra.mxu0 %v518
        %525 = vmatprep.subr.mxu0 0.0
        %526 = vmatpush1.msra.mxu0 0.0
        %527 = vmatprep.subr.mxu0 0.0
        %528 = vmatpush1.msra.mxu0 0.0
        %529 = vmatprep.subr.mxu0 0.0
        %530 = vmatpush1.msra.mxu0 0.0
        %531 = vmatprep.subr.mxu0 0.0
        %532 = vmatpush1.msra.mxu0 0.0
        %533 = vmatprep.subr.mxu0 0.0
        %534 = vmatpush1.msra.mxu0 0.0
        %535 = vmatprep.subr.mxu0 0.0
        %536 = vmatpush1.msra.mxu0 0.0
        %537 = vmatprep.subr.mxu0 0.0
        %538 = vmatpush1.msra.mxu0 0.0
        %539 = vmatprep.subr.mxu0 0.0
        %540 = vmatpush1.msra.mxu0 0.0
        %541 = vmatprep.subr.mxu0 0.0
        %542 = vmatpush1.msra.mxu0 0.0
        %543 = vmatprep.subr.mxu0 0.0
        %544 = vmatpush1.msra.mxu0 0.0
        %545 = vmatprep.subr.mxu0 0.0
        %546 = vmatpush1.msra.mxu0 0.0
        %547 = vmatprep.subr.mxu0 0.0
        %548 = vmatpush1.msra.mxu0 0.0
        %549 = vmatprep.subr.mxu0 0.0
        %550 = vmatpush1.msra.mxu0 0.0
        %551 = vmatprep.subr.mxu0 0.0
        %552 = vmatpush1.msra.mxu0 0.0
        %553 = vmatprep.subr.mxu0 0.0
        %554 = vmatpush1.msra.mxu0 0.0
        %555 = vmatprep.subr.mxu0 0.0
        %556 = vmatpush1.msra.mxu0 0.0
        %557 = vmatprep.subr.mxu0 0.0
        %558 = vmatpush1.msra.mxu0 0.0
        %559 = vmatprep.subr.mxu0 0.0
        %560 = vmatpush1.msra.mxu0 0.0
        %561 = vmatprep.subr.mxu0 0.0
        %562 = vmatpush1.msra.mxu0 0.0
        %563 = vmatprep.subr.mxu0 0.0
        %564 = vmatpush1.msra.mxu0 0.0
        %565 = vmatprep.subr.mxu0 0.0
        %566 = vmatpush1.msra.mxu0 0.0
        %567 = vmatprep.subr.mxu0 0.0
        %568 = vmatpush1.msra.mxu0 0.0
        %569 = vmatprep.subr.mxu0 0.0
        %570 = vmatpush1.msra.mxu0 0.0
        %571 = vmatprep.subr.mxu0 0.0
        %572 = vmatpush1.msra.mxu0 0.0
        %573 = vmatprep.subr.mxu0 0.0
        %574 = vmatpush1.msra.mxu0 0.0
        %575 = vmatprep.subr.mxu0 0.0
        %576 = vmatpush1.msra.mxu0 0.0
        %577 = vmatprep.subr.mxu0 0.0
        %578 = vmatpush1.msra.mxu0 0.0
        %579 = vmatprep.subr.mxu0 0.0
        %580 = vmatpush1.msra.mxu0 0.0
        %581 = vmatprep.subr.mxu0 0.0
        %582 = vmatpush1.msra.mxu0 0.0
        %583 = vmatprep.subr.mxu0 0.0
        %584 = vmatpush1.msra.mxu0 0.0
        %585 = vmatprep.mubr.f32.mxu0 0.0
        %586 = vmatmul.mubr.f32.gmra.mrb[0].mxu0 %v355
        %v587 = vpop.f32.mrb[0].mxu0
        %v588 = vadd.f32 0.0, %v587
        %v589 = vpop.f32.mrb[0].mxu0
        %590 = vmatprep.mubr.f32.mxu0 0.0
        %591 = vmatmul.mubr.f32.gmra.mrb[0].mxu0 %v358
        %v592 = vpop.f32.mrb[0].mxu0
        %v593 = vadd.f32 0.0, %v592
        %v594 = vpop.f32.mrb[0].mxu0
        %595 = vdwg.mxu0
        %s596 = scalar_lea.vmem %s265, 16 [#allocation8]
        %597 = vst.msk [vmem:[%s596] sm:$0xff] %vm272, %v588
        %598 = vst.msk [vmem:[%s596 + $0x8] sm:$0xff] %vm272, %v593
        %s599 = scalar_lea.vmem %s215, 32 [#allocation2]
        %v600 = vld [vmem:[%s599] sm:$0xff]
        %v601 = vld [vmem:[%s599 + $0x8] sm:$0xff]
        %v603 = vsel %vm272, %v600, 0
        %v606 = vsel %vm272, %v601, 0
        %608 = vmatprep.subr.mxu0 0.0
        %609 = vmatpush1.msra.mxu0 %v268
        %610 = vmatprep.subr.mxu0 0.0
        %611 = vmatpush1.msra.mxu0 %v269
        %612 = vmatprep.subr.mxu0 0.0
        %613 = vmatpush1.msra.mxu0 0.0
        %614 = vmatprep.subr.mxu0 0.0
        %615 = vmatpush1.msra.mxu0 0.0
        %616 = vmatprep.subr.mxu0 0.0
        %617 = vmatpush1.msra.mxu0 0.0
        %618 = vmatprep.subr.mxu0 0.0
        %619 = vmatpush1.msra.mxu0 0.0
        %620 = vmatprep.subr.mxu0 0.0
        %621 = vmatpush1.msra.mxu0 0.0
        %622 = vmatprep.subr.mxu0 0.0
        %623 = vmatpush1.msra.mxu0 0.0
        %624 = vmatprep.subr.mxu0 0.0
        %625 = vmatpush1.msra.mxu0 0.0
        %626 = vmatprep.subr.mxu0 0.0
        %627 = vmatpush1.msra.mxu0 0.0
        %628 = vmatprep.subr.mxu0 0.0
        %629 = vmatpush1.msra.mxu0 0.0
        %630 = vmatprep.subr.mxu0 0.0
        %631 = vmatpush1.msra.mxu0 0.0
        %632 = vmatprep.subr.mxu0 0.0
        %633 = vmatpush1.msra.mxu0 0.0
        %634 = vmatprep.subr.mxu0 0.0
        %635 = vmatpush1.msra.mxu0 0.0
        %636 = vmatprep.subr.mxu0 0.0
        %637 = vmatpush1.msra.mxu0 0.0
        %638 = vmatprep.subr.mxu0 0.0
        %639 = vmatpush1.msra.mxu0 0.0
        %640 = vmatprep.subr.mxu0 0.0
        %641 = vmatpush1.msra.mxu0 0.0
        %642 = vmatprep.subr.mxu0 0.0
        %643 = vmatpush1.msra.mxu0 0.0
        %644 = vmatprep.subr.mxu0 0.0
        %645 = vmatpush1.msra.mxu0 0.0
        %646 = vmatprep.subr.mxu0 0.0
        %647 = vmatpush1.msra.mxu0 0.0
        %648 = vmatprep.subr.mxu0 0.0
        %649 = vmatpush1.msra.mxu0 0.0
        %650 = vmatprep.subr.mxu0 0.0
        %651 = vmatpush1.msra.mxu0 0.0
        %652 = vmatprep.subr.mxu0 0.0
        %653 = vmatpush1.msra.mxu0 0.0
        %654 = vmatprep.subr.mxu0 0.0
        %655 = vmatpush1.msra.mxu0 0.0
        %656 = vmatprep.subr.mxu0 0.0
        %657 = vmatpush1.msra.mxu0 0.0
        %658 = vmatprep.subr.mxu0 0.0
        %659 = vmatpush1.msra.mxu0 0.0
        %660 = vmatprep.subr.mxu0 0.0
        %661 = vmatpush1.msra.mxu0 0.0
        %662 = vmatprep.subr.mxu0 0.0
        %663 = vmatpush1.msra.mxu0 0.0
        %664 = vmatprep.subr.mxu0 0.0
        %665 = vmatpush1.msra.mxu0 0.0
        %666 = vmatprep.subr.mxu0 0.0
        %667 = vmatpush1.msra.mxu0 0.0
        %668 = vmatprep.subr.mxu0 0.0
        %669 = vmatpush1.msra.mxu0 0.0
        %670 = vmatprep.subr.mxu0 0.0
        %671 = vmatpush1.msra.mxu0 0.0
        %672 = vmatprep.mubr.f32.mxu0 0.0
        %673 = vmatmul.mubr.f32.gmra.mrb[0].mxu0 %v603
        %v674 = vpop.f32.mrb[0].mxu0
        %v675 = vadd.f32 0.0, %v674
        %v676 = vpop.f32.mrb[0].mxu0
        %677 = vmatprep.mubr.f32.mxu0 0.0
        %678 = vmatmul.mubr.f32.gmra.mrb[0].mxu0 %v606
        %v679 = vpop.f32.mrb[0].mxu0
        %v680 = vadd.f32 0.0, %v679
        %v681 = vpop.f32.mrb[0].mxu0
        %682 = vdwg.mxu0
        %683 = vmatprep.subr.mxu0 0.0
        %684 = vmatpush1.msra.mxu0 %v675
        %685 = vmatprep.subr.mxu0 0.0
        %686 = vmatpush1.msra.mxu0 %v680
        %687 = vmatprep.subr.mxu0 0.0
        %688 = vmatpush1.msra.mxu0 0.0
        %689 = vmatprep.subr.mxu0 0.0
        %690 = vmatpush1.msra.mxu0 0.0
        %691 = vmatprep.subr.mxu0 0.0
        %692 = vmatpush1.msra.mxu0 0.0
        %693 = vmatprep.subr.mxu0 0.0
        %694 = vmatpush1.msra.mxu0 0.0
        %695 = vmatprep.subr.mxu0 0.0
        %696 = vmatpush1.msra.mxu0 0.0
        %697 = vmatprep.subr.mxu0 0.0
        %698 = vmatpush1.msra.mxu0 0.0
        %699 = vmatprep.subr.mxu0 0.0
        %700 = vmatpush1.msra.mxu0 0.0
        %701 = vmatprep.subr.mxu0 0.0
        %702 = vmatpush1.msra.mxu0 0.0
        %703 = vmatprep.subr.mxu0 0.0
        %704 = vmatpush1.msra.mxu0 0.0
        %705 = vmatprep.subr.mxu0 0.0
        %706 = vmatpush1.msra.mxu0 0.0
        %707 = vmatprep.subr.mxu0 0.0
        %708 = vmatpush1.msra.mxu0 0.0
        %709 = vmatprep.subr.mxu0 0.0
        %710 = vmatpush1.msra.mxu0 0.0
        %711 = vmatprep.subr.mxu0 0.0
        %712 = vmatpush1.msra.mxu0 0.0
        %713 = vmatprep.subr.mxu0 0.0
        %714 = vmatpush1.msra.mxu0 0.0
        %715 = vmatprep.subr.mxu0 0.0
        %716 = vmatpush1.msra.mxu0 0.0
        %717 = vmatprep.subr.mxu0 0.0
        %718 = vmatpush1.msra.mxu0 0.0
        %719 = vmatprep.subr.mxu0 0.0
        %720 = vmatpush1.msra.mxu0 0.0
        %721 = vmatprep.subr.mxu0 0.0
        %722 = vmatpush1.msra.mxu0 0.0
        %723 = vmatprep.subr.mxu0 0.0
        %724 = vmatpush1.msra.mxu0 0.0
        %725 = vmatprep.subr.mxu0 0.0
        %726 = vmatpush1.msra.mxu0 0.0
        %727 = vmatprep.subr.mxu0 0.0
        %728 = vmatpush1.msra.mxu0 0.0
        %729 = vmatprep.subr.mxu0 0.0
        %730 = vmatpush1.msra.mxu0 0.0
        %731 = vmatprep.subr.mxu0 0.0
        %732 = vmatpush1.msra.mxu0 0.0
        %733 = vmatprep.subr.mxu0 0.0
        %734 = vmatpush1.msra.mxu0 0.0
        %735 = vmatprep.subr.mxu0 0.0
        %736 = vmatpush1.msra.mxu0 0.0
        %737 = vmatprep.subr.mxu0 0.0
        %738 = vmatpush1.msra.mxu0 0.0
        %739 = vmatprep.subr.mxu0 0.0
        %740 = vmatpush1.msra.mxu0 0.0
        %741 = vmatprep.subr.mxu0 0.0
        %742 = vmatpush1.msra.mxu0 0.0
        %743 = vmatprep.subr.mxu0 0.0
        %744 = vmatpush1.msra.mxu0 0.0
        %745 = vmatprep.subr.mxu0 0.0
        %746 = vmatpush1.msra.mxu0 0.0
        %747 = vmatprep.mubr.f32.mxu0 0.0
        %748 = vmatmul.mubr.f32.gmra.mrb[0].mxu0 %v355
        %v749 = vpop.f32.mrb[0].mxu0
        %v750 = vadd.f32 0.0, %v749
        %v751 = vpop.f32.mrb[0].mxu0
        %752 = vmatprep.mubr.f32.mxu0 0.0
        %753 = vmatmul.mubr.f32.gmra.mrb[0].mxu0 %v358
        %v754 = vpop.f32.mrb[0].mxu0
        %v755 = vadd.f32 0.0, %v754
        %v756 = vpop.f32.mrb[0].mxu0
        %757 = vdwg.mxu0
        %s758 = scalar_lea.vmem %s265, 32 [#allocation8]
        %759 = vst.msk [vmem:[%s758] sm:$0xff] %vm272, %v750
        %760 = vst.msk [vmem:[%s758 + $0x8] sm:$0xff] %vm272, %v755
        %s761 = scalar_lea.vmem %s215, 48 [#allocation2]
        %v762 = vld [vmem:[%s761] sm:$0xff]
        %v763 = vld [vmem:[%s761 + $0x8] sm:$0xff]
        %v765 = vsel %vm272, %v762, 0
        %v768 = vsel %vm272, %v763, 0
        %770 = vmatprep.subr.mxu0 0.0
        %771 = vmatpush1.msra.mxu0 %v268
        %772 = vmatprep.subr.mxu0 0.0
        %773 = vmatpush1.msra.mxu0 %v269
        %774 = vmatprep.subr.mxu0 0.0
        %775 = vmatpush1.msra.mxu0 0.0
        %776 = vmatprep.subr.mxu0 0.0
        %777 = vmatpush1.msra.mxu0 0.0
        %778 = vmatprep.subr.mxu0 0.0
        %779 = vmatpush1.msra.mxu0 0.0
        %780 = vmatprep.subr.mxu0 0.0
        %781 = vmatpush1.msra.mxu0 0.0
        %782 = vmatprep.subr.mxu0 0.0
        %783 = vmatpush1.msra.mxu0 0.0
        %784 = vmatprep.subr.mxu0 0.0
        %785 = vmatpush1.msra.mxu0 0.0
        %786 = vmatprep.subr.mxu0 0.0
        %787 = vmatpush1.msra.mxu0 0.0
        %788 = vmatprep.subr.mxu0 0.0
        %789 = vmatpush1.msra.mxu0 0.0
        %790 = vmatprep.subr.mxu0 0.0
        %791 = vmatpush1.msra.mxu0 0.0
        %792 = vmatprep.subr.mxu0 0.0
        %793 = vmatpush1.msra.mxu0 0.0
        %794 = vmatprep.subr.mxu0 0.0
        %795 = vmatpush1.msra.mxu0 0.0
        %796 = vmatprep.subr.mxu0 0.0
        %797 = vmatpush1.msra.mxu0 0.0
        %798 = vmatprep.subr.mxu0 0.0
        %799 = vmatpush1.msra.mxu0 0.0
        %800 = vmatprep.subr.mxu0 0.0
        %801 = vmatpush1.msra.mxu0 0.0
        %802 = vmatprep.subr.mxu0 0.0
        %803 = vmatpush1.msra.mxu0 0.0
        %804 = vmatprep.subr.mxu0 0.0
        %805 = vmatpush1.msra.mxu0 0.0
        %806 = vmatprep.subr.mxu0 0.0
        %807 = vmatpush1.msra.mxu0 0.0
        %808 = vmatprep.subr.mxu0 0.0
        %809 = vmatpush1.msra.mxu0 0.0
        %810 = vmatprep.subr.mxu0 0.0
        %811 = vmatpush1.msra.mxu0 0.0
        %812 = vmatprep.subr.mxu0 0.0
        %813 = vmatpush1.msra.mxu0 0.0
        %814 = vmatprep.subr.mxu0 0.0
        %815 = vmatpush1.msra.mxu0 0.0
        %816 = vmatprep.subr.mxu0 0.0
        %817 = vmatpush1.msra.mxu0 0.0
        %818 = vmatprep.subr.mxu0 0.0
        %819 = vmatpush1.msra.mxu0 0.0
        %820 = vmatprep.subr.mxu0 0.0
        %821 = vmatpush1.msra.mxu0 0.0
        %822 = vmatprep.subr.mxu0 0.0
        %823 = vmatpush1.msra.mxu0 0.0
        %824 = vmatprep.subr.mxu0 0.0
        %825 = vmatpush1.msra.mxu0 0.0
        %826 = vmatprep.subr.mxu0 0.0
        %827 = vmatpush1.msra.mxu0 0.0
        %828 = vmatprep.subr.mxu0 0.0
        %829 = vmatpush1.msra.mxu0 0.0
        %830 = vmatprep.subr.mxu0 0.0
        %831 = vmatpush1.msra.mxu0 0.0
        %832 = vmatprep.subr.mxu0 0.0
        %833 = vmatpush1.msra.mxu0 0.0
        %834 = vmatprep.mubr.f32.mxu0 0.0
        %835 = vmatmul.mubr.f32.gmra.mrb[0].mxu0 %v765
        %v836 = vpop.f32.mrb[0].mxu0
        %v837 = vadd.f32 0.0, %v836
        %v838 = vpop.f32.mrb[0].mxu0
        %839 = vmatprep.mubr.f32.mxu0 0.0
        %840 = vmatmul.mubr.f32.gmra.mrb[0].mxu0 %v768
        %v841 = vpop.f32.mrb[0].mxu0
        %v842 = vadd.f32 0.0, %v841
        %v843 = vpop.f32.mrb[0].mxu0
        %844 = vdwg.mxu0
        %845 = vmatprep.subr.mxu0 0.0
        %846 = vmatpush1.msra.mxu0 %v837
        %847 = vmatprep.subr.mxu0 0.0
        %848 = vmatpush1.msra.mxu0 %v842
        %849 = vmatprep.subr.mxu0 0.0
        %850 = vmatpush1.msra.mxu0 0.0
        %851 = vmatprep.subr.mxu0 0.0
        %852 = vmatpush1.msra.mxu0 0.0
        %853 = vmatprep.subr.mxu0 0.0
        %854 = vmatpush1.msra.mxu0 0.0
        %855 = vmatprep.subr.mxu0 0.0
        %856 = vmatpush1.msra.mxu0 0.0
        %857 = vmatprep.subr.mxu0 0.0
        %858 = vmatpush1.msra.mxu0 0.0
        %859 = vmatprep.subr.mxu0 0.0
        %860 = vmatpush1.msra.mxu0 0.0
        %861 = vmatprep.subr.mxu0 0.0
        %862 = vmatpush1.msra.mxu0 0.0
        %863 = vmatprep.subr.mxu0 0.0
        %864 = vmatpush1.msra.mxu0 0.0
        %865 = vmatprep.subr.mxu0 0.0
        %866 = vmatpush1.msra.mxu0 0.0
        %867 = vmatprep.subr.mxu0 0.0
        %868 = vmatpush1.msra.mxu0 0.0
        %869 = vmatprep.subr.mxu0 0.0
        %870 = vmatpush1.msra.mxu0 0.0
        %871 = vmatprep.subr.mxu0 0.0
        %872 = vmatpush1.msra.mxu0 0.0
        %873 = vmatprep.subr.mxu0 0.0
        %874 = vmatpush1.msra.mxu0 0.0
        %875 = vmatprep.subr.mxu0 0.0
        %876 = vmatpush1.msra.mxu0 0.0
        %877 = vmatprep.subr.mxu0 0.0
        %878 = vmatpush1.msra.mxu0 0.0
        %879 = vmatprep.subr.mxu0 0.0
        %880 = vmatpush1.msra.mxu0 0.0
        %881 = vmatprep.subr.mxu0 0.0
        %882 = vmatpush1.msra.mxu0 0.0
        %883 = vmatprep.subr.mxu0 0.0
        %884 = vmatpush1.msra.mxu0 0.0
        %885 = vmatprep.subr.mxu0 0.0
        %886 = vmatpush1.msra.mxu0 0.0
        %887 = vmatprep.subr.mxu0 0.0
        %888 = vmatpush1.msra.mxu0 0.0
        %889 = vmatprep.subr.mxu0 0.0
        %890 = vmatpush1.msra.mxu0 0.0
        %891 = vmatprep.subr.mxu0 0.0
        %892 = vmatpush1.msra.mxu0 0.0
        %893 = vmatprep.subr.mxu0 0.0
        %894 = vmatpush1.msra.mxu0 0.0
        %895 = vmatprep.subr.mxu0 0.0
        %896 = vmatpush1.msra.mxu0 0.0
        %897 = vmatprep.subr.mxu0 0.0
        %898 = vmatpush1.msra.mxu0 0.0
        %899 = vmatprep.subr.mxu0 0.0
        %900 = vmatpush1.msra.mxu0 0.0
        %901 = vmatprep.subr.mxu0 0.0
        %902 = vmatpush1.msra.mxu0 0.0
        %903 = vmatprep.subr.mxu0 0.0
        %904 = vmatpush1.msra.mxu0 0.0
        %905 = vmatprep.subr.mxu0 0.0
        %906 = vmatpush1.msra.mxu0 0.0
        %907 = vmatprep.subr.mxu0 0.0
        %908 = vmatpush1.msra.mxu0 0.0
        %909 = vmatprep.mubr.f32.mxu0 0.0
        %910 = vmatmul.mubr.f32.gmra.mrb[0].mxu0 %v355
        %v911 = vpop.f32.mrb[0].mxu0
        %v912 = vadd.f32 0.0, %v911
        %v913 = vpop.f32.mrb[0].mxu0
        %914 = vmatprep.mubr.f32.mxu0 0.0
        %915 = vmatmul.mubr.f32.gmra.mrb[0].mxu0 %v358
        %v916 = vpop.f32.mrb[0].mxu0
        %v917 = vadd.f32 0.0, %v916
        %v918 = vpop.f32.mrb[0].mxu0
        %919 = vdwg.mxu0
        %s920 = scalar_lea.vmem %s265, 48 [#allocation8]
        %921 = vst.msk [vmem:[%s920] sm:$0xff] %vm272, %v912
        %922 = vst.msk [vmem:[%s920 + $0x8] sm:$0xff] %vm272, %v917
        %s923 = sand.u32 %s109, 1
        %s924 = scalar_lea.sflag [#allocation4], %s923
        %s925 = sand.u32 %s109, 1
        %s926 = smul.addr %s925, 64
        %s927 = scalar_lea.vmem [#allocation8], %s926
        // Predicated region
        $region45: #{tpu_custom_call.1} parent=31 // pred_check
          %p928 = pneg %p119
        $region46: #{tpu_custom_call.1} parent=31 // pred_check_branch
          %930 = sbr.rel (%p928) target = $region48
        $region47: #{tpu_custom_call.1} parent=31 // pred_region
          %s932 = ssub.s32 1024, 1024
          %933 = vsyncadd %s924, %s932
          %s934 = smul.addr %s23, 8
          %s935 = smul.addr %s934, 128
          %s936 = scalar_lea.hbm %s3, %s935
          %s937 = sshll.u32 %s927, 4
          %s938 = int_to_ptr.vmem [resolvable:$true] %s937
          %943 = dma.vmem_to_hbm [thread:$0]  %s938, 1024, %s936, %s924, 128, 128, 8
        $region48: #{tpu_custom_call.1} parent=31 // pred_fallthru
          _
      $region32: #{tpu_custom_call.1} parent=5 // pred_fallthru
        _
      %p944 = scmp.le.s32.totalorder 2, %s18
      // Predicated region
      $region49: #{tpu_custom_call.1} parent=5 // pred_check
        %p945 = pneg %p944
      $region50: #{tpu_custom_call.1} parent=5 // pred_check_branch
        %947 = sbr.rel (%p945) target = $region52
      $region51: #{tpu_custom_call.1} parent=5 // pred_region
        %s948 = ssub.s32 %s18, 2
        // Predicated region
        $region53: #{tpu_custom_call.1} parent=51 // pred_check
          %p949 = pneg %p125
        $region54: #{tpu_custom_call.1} parent=51 // pred_check_branch
          %951 = sbr.rel (%p949) target = $region56
        $region55: #{tpu_custom_call.1} parent=51 // pred_region
          %s952 = sand.u32 %s110, 1
          %s953 = scalar_lea.sflag [#allocation4], %s952
          %s954 = sand.u32 %s110, 1
          %s955 = smul.addr %s954, 64
          %s956 = scalar_lea.vmem [#allocation8], %s955
          %957 = dma.done %s953, 1024
        $region56: #{tpu_custom_call.1} parent=51 // pred_fallthru
          _
      $region52: #{tpu_custom_call.1} parent=5 // pred_fallthru
        _
    $region6: #{tpu_custom_call.1} parent=1 // loop_footer
      %s22 = sadd.s32 1, %s18
    $region7: #{tpu_custom_call.1} parent=1 // loop_footer_branch
      %17 = sbr.rel target = $region3
    $region8: #{tpu_custom_call.1} parent=1 // loop_exit
      _
    %958 = vsyncpa [#allocation3], 1
    %s959 = scalar_lea.sflag [#allocation3], 1
    %960 = vsyncpa %s959, 1
    %961 = vsyncpa [#allocation6], 1
    %s962 = scalar_lea.sflag [#allocation6], 1
    %963 = vsyncpa %s962, 1
    %964 = vsyncpa [#allocation4], 1
    %s965 = scalar_lea.sflag [#allocation4], 1
    %966 = vsyncpa %s965, 1

</llo_original>
